<compile_context>
chip_gen: v7x
topology: tpu7x:2x2x1
jax: 0.10.0
libtpu: 0.0.40
codegen_flags: <defaults>
</compile_context>

<pallas_src>
import jax
import jax.numpy as jnp
from jax.experimental import pallas as pl
from jax.experimental.pallas import tpu as pltpu


def _round_up(x, m):
    return ((x + m - 1) // m) * m


def masked_avg_kernel(seq_ref, mask_ref, out_ref):
    # seq_ref: (Bt, T, E_pad), mask_ref: (Bt, T, 1), out_ref: (Bt, E_pad)
    seq = seq_ref[...].astype(jnp.float32)        # f32 accumulation path
    m = mask_ref[...].astype(jnp.float32)         # (Bt, T, 1), 0/1 values
    # mask values are 0/1, so `mask.int() * seq` == `mask * seq`; skip the
    # int32 round-trip (pure VPU hygiene, reduces live vregs).
    masked = m * seq                              # lane-broadcast multiply
    summed = jnp.sum(masked, axis=1)              # (Bt, E_pad), f32 accumulate
    counts = jnp.sum(m, axis=1)                   # (Bt, 1)
    out_ref[...] = (summed / (counts + 1e-10)).astype(out_ref.dtype)


def _choose_batch_tile(B, T, E_pad, seq_itemsize, mask_itemsize):
    """Pick Bt (multiple of 8) so the double-buffered working set fits a
    conservative VMEM budget on all generations (incl. v7x's 64 MiB physical
    / 32 MiB scoped), keeping >=2 grid steps when possible for megacore."""
    budget = 12 * 1024 * 1024  # bytes; well under half the 32 MiB scoped limit

    t_sub = max(_round_up(T, 8), 8)

    def working_set(bt):
        seq_bytes = bt * t_sub * E_pad * seq_itemsize
        # (bt, T, 1) mask tile lane-pads its last dim 1 -> 128 in VMEM.
        mask_bytes = bt * t_sub * 128 * mask_itemsize
        out_bytes = bt * E_pad * 4
        return 2 * (seq_bytes + mask_bytes + out_bytes)  # double buffered

    b_ceil = max(8, _round_up(B, 8))
    bt = 8
    while bt * 2 <= b_ceil and working_set(bt * 2) <= budget:
        bt *= 2
    # Keep at least 2 grid steps (when B allows) so the "parallel" batch axis
    # can be split across the 2 TensorCores on v7x.
    while bt > 8 and pl.cdiv(b_ceil, bt) < 2:
        bt //= 2
    return bt


def masked_average(seq, mask):
    """seq: [B, T, E] float; mask: [B, T, 1] or [B, T] with 0/1 values.
    Returns [B, E]."""
    if mask is None:
        return None

    B, T, E = seq.shape
    if mask.ndim < seq.ndim:
        mask = mask[..., None]            # [B, T] -> [B, T, 1] (free reshape)
    if mask.dtype == jnp.bool_:
        mask = mask.astype(jnp.int8)      # avoid bool refs; still no f32 copy

    # Pad E to a multiple of 128 so the (Bt, E) output block stores are
    # lane-dense, unmasked vst.
    E_pad = _round_up(E, 128)
    if E_pad != E:
        seq = jnp.pad(seq, ((0, 0), (0, 0), (0, E_pad - E)))

    bt = _choose_batch_tile(B, T, E_pad, seq.dtype.itemsize, mask.dtype.itemsize)

    # Pad B so every grid step sees a full (bt, ...) block; padded rows compute
    # 0 / 1e-10 = 0 and are sliced off below.
    B_pad = _round_up(B, bt)
    if B_pad != B:
        seq = jnp.pad(seq, ((0, B_pad - B), (0, 0), (0, 0)))
        mask = jnp.pad(mask, ((0, B_pad - B), (0, 0), (0, 0)))

    grid = (B_pad // bt,)

    out = pl.pallas_call(
        masked_avg_kernel,
        out_shape=jax.ShapeDtypeStruct((B_pad, E_pad), seq.dtype),
        grid_spec=pltpu.PrefetchScalarGridSpec(
            num_scalar_prefetch=0,
            grid=grid,
            in_specs=[
                pl.BlockSpec((bt, T, E_pad), lambda b: (b, 0, 0)),
                pl.BlockSpec((bt, T, 1), lambda b: (b, 0, 0)),
            ],
            out_specs=pl.BlockSpec((bt, E_pad), lambda b: (b, 0)),
        ),
        compiler_params=pltpu.CompilerParams(
            dimension_semantics=("parallel",),
            vmem_limit_bytes=32 * 1024 * 1024,
        ),
    )(seq, mask)

    return out[:B, :E]


def masked_average_ref(seq, mask):
    if mask.ndim < seq.ndim:
        mask = mask[..., None]
    m = mask.astype(jnp.float32)
    masked = m * seq.astype(jnp.float32)
    counts = jnp.sum(m, axis=1)
    return (jnp.sum(masked, axis=1) / (counts + 1e-10)).astype(seq.dtype)


if __name__ == "__main__":
    B, T, E = 2, 8, 32
    key = jax.random.PRNGKey(0)
    k_seq, k_mask = jax.random.split(key)

    seq = jax.random.normal(k_seq, (B, T, E), dtype=jnp.float32)
    mask = (jax.random.uniform(k_mask, (B, T, 1)) > 0.5).astype(jnp.float32)

    out = masked_average(seq, mask)
    jax.block_until_ready(out)

    ref = masked_average_ref(seq, mask)
    assert out.shape == (B, E)
    assert jnp.allclose(out, ref, atol=1e-5, rtol=1e-5), "mismatch vs reference"

    print("KERNEL_OK")
</pallas_src>

<mosaic_0001>
module attributes {stable_mosaic.version = 11 : i64} {
  func.func @masked_avg_kernel(%arg0: i32, %arg1: memref<8x8x128xf32, #tpu.memory_space<vmem>>, %arg2: memref<8x8x1xf32, #tpu.memory_space<vmem>>, %arg3: memref<8x128xf32, #tpu.memory_space<vmem>>) attributes {dimension_semantics = [#tpu.dimension_semantics<parallel>], iteration_bounds = array<i64: 1>, scalar_prefetch = 0 : i64, scratch_operands = 0 : i64, tpu.core_type = #tpu.core_type<tc>, window_params = [{transform_indices = @transform_0, window_bounds = array<i64: 8, 8, 128>}, {transform_indices = @transform_1, window_bounds = array<i64: 8, 8, 1>}, {transform_indices = @transform_2, window_bounds = array<i64: 8, 128>}]} {
    %c0 = arith.constant 0 : index
    %c0_0 = arith.constant 0 : index
    %c0_1 = arith.constant 0 : index
    %0 = vector.load %arg1[%c0, %c0_0, %c0_1] : memref<8x8x128xf32, #tpu.memory_space<vmem>>, vector<8x8x128xf32>
    %c0_2 = arith.constant 0 : index
    %c0_3 = arith.constant 0 : index
    %c0_4 = arith.constant 0 : index
    %1 = vector.load %arg2[%c0_2, %c0_3, %c0_4] : memref<8x8x1xf32, #tpu.memory_space<vmem>>, vector<8x8x1xf32>
    %2 = vector.broadcast %1 : vector<8x8x1xf32> to vector<8x8x128xf32>
    %3 = arith.mulf %2, %0 : vector<8x8x128xf32>
    %cst = arith.constant dense<0.000000e+00> : vector<8x128xf32>
    %4 = vector.multi_reduction <add>, %3, %cst [1] : vector<8x8x128xf32> to vector<8x128xf32>
    %cst_5 = arith.constant dense<0.000000e+00> : vector<8x1xf32>
    %5 = vector.multi_reduction <add>, %1, %cst_5 [1] : vector<8x8x1xf32> to vector<8x1xf32>
    %cst_6 = arith.constant 1.000000e-10 : f32
    %6 = vector.broadcast %cst_6 : f32 to vector<8x1xf32>
    %7 = arith.addf %5, %6 : vector<8x1xf32>
    %8 = vector.broadcast %7 : vector<8x1xf32> to vector<8x128xf32>
    %9 = arith.divf %4, %8 : vector<8x128xf32>
    %c0_7 = arith.constant 0 : index
    %c0_8 = arith.constant 0 : index
    %10 = vector.load %arg3[%c0_7, %c0_8] : memref<8x128xf32, #tpu.memory_space<vmem>>, vector<8x128xf32>
    tpu.vector_store %arg3[%c0_7, %c0_8], %9 {strides = array<i32>} : memref<8x128xf32, #tpu.memory_space<vmem>>, vector<8x128xf32>,
    return
  }
  func.func @transform_0(%arg0: i32) -> (i32, i32, i32) {
    %c0_i32 = arith.constant 0 : i32
    %c0_i32_0 = arith.constant 0 : i32
    %c0_i32_1 = arith.constant 0 : i32
    return %arg0, %c0_i32, %c0_i32_0 : i32, i32, i32
  }
  func.func @transform_1(%arg0: i32) -> (i32, i32, i32) {
    %c0_i32 = arith.constant 0 : i32
    %c0_i32_0 = arith.constant 0 : i32
    %c0_i32_1 = arith.constant 0 : i32
    return %arg0, %c0_i32, %c0_i32_0 : i32, i32, i32
  }
  func.func @transform_2(%arg0: i32) -> (i32, i32) {
    %c0_i32 = arith.constant 0 : i32
    %c0_i32_0 = arith.constant 0 : i32
    return %arg0, %c0_i32 : i32, i32
  }
}

</mosaic_0001>

<llo_original>
// kernel: tpu_custom_call.1
$region0: #{tpu_custom_call.1}
  #allocation0 [shape = 'u32[]', space=smem, size = 0x4, offset = 0x4, fixed_abs, tag = 'smem constant byte address 0x4 - core index']
  #allocation1 [shape = 'u32[144,128]{1,0:T(1,128)}', space=vmem, size = 0x12000, scoped, tag = 'internal scratch']
  %s0 = inlined_call_operand.vmem [shape: f32[8,8,128], index: 0, kind: input, shape index: {}]
  %s1 = inlined_call_operand.vmem [shape: f32[8,8,1], index: 1, kind: input, shape index: {}]
  %s2 = inlined_call_operand.hbm [shape: f32[8,128], index: 2, kind: output, shape index: {}]
  %s3 = sld [smem:[#allocation0]]
  $region18: #{tpu_custom_call.1} parent=0
    _
  %s5 = ssub.s32 1, %s3
  %s6 = scalar_select 0, %s5, %s3
  $region1: #{tpu_custom_call.1} parent=0
    #allocation2 [shape = 'u8[4096]{0}', space=vmem, size = 0x1000, scoped, tag = 'output window, operand 0, single buffered']
    #allocation3 [shape = 's32[1]{0}', space=sflag, size = 0x4, scoped, tag = 'scoped memory for tpu_custom_call.1']
    %7 = vsyncpa [#allocation3], 0
    // Predicated region
    $region2: #{tpu_custom_call.1} parent=1 // pred_check
      _
    $region3: #{tpu_custom_call.1} parent=1 // pred_check_branch
      %9 = sbr.rel (0) target = $region5
    $region4: #{tpu_custom_call.1} parent=1 // pred_region
      _
    $region5: #{tpu_custom_call.1} parent=1 // pred_fallthru
      _
    // Predicated region
    $region6: #{tpu_custom_call.1} parent=1 // pred_check
      _
    $region7: #{tpu_custom_call.1} parent=1 // pred_check_branch
      %11 = sbr.rel (0) target = $region9
    $region8: #{tpu_custom_call.1} parent=1 // pred_region
      _
    $region9: #{tpu_custom_call.1} parent=1 // pred_fallthru
      _
    %v12 = vld [vmem:[%s0] sm:$0xff]
    %v13 = vld [vmem:[%s0 + $0x8] sm:$0xff]
    %v14 = vld [vmem:[%s0 + $0x10] sm:$0xff]
    %v15 = vld [vmem:[%s0 + $0x18] sm:$0xff]
    %v16 = vld [vmem:[%s0 + $0x20] sm:$0xff]
    %v17 = vld [vmem:[%s0 + $0x28] sm:$0xff]
    %v18 = vld [vmem:[%s0 + $0x30] sm:$0xff]
    %v19 = vld [vmem:[%s0 + $0x38] sm:$0xff]
    %v20 = vld [vmem:[%s1] sm:$0xff]
    %v21 = vld [vmem:[%s1 + $0x8] sm:$0xff]
    %v22 = vld [vmem:[%s1 + $0x10] sm:$0xff]
    %v23 = vld [vmem:[%s1 + $0x18] sm:$0xff]
    %v24 = vld [vmem:[%s1 + $0x20] sm:$0xff]
    %v25 = vld [vmem:[%s1 + $0x28] sm:$0xff]
    %v26 = vld [vmem:[%s1 + $0x30] sm:$0xff]
    %v27 = vld [vmem:[%s1 + $0x38] sm:$0xff]
    %29 = vset.pattern.permute.xlu0 0
    %30 = vperm.xlu0 %29, %v20
    %v31 = vpop.permute.xlu0 %30
    %34 = vset.pattern.permute.xlu0 0
    %35 = vperm.xlu0 %34, %v21
    %v36 = vpop.permute.xlu0 %35
    %39 = vset.pattern.permute.xlu0 0
    %40 = vperm.xlu0 %39, %v22
    %v41 = vpop.permute.xlu0 %40
    %44 = vset.pattern.permute.xlu0 0
    %45 = vperm.xlu0 %44, %v23
    %v46 = vpop.permute.xlu0 %45
    %49 = vset.pattern.permute.xlu0 0
    %50 = vperm.xlu0 %49, %v24
    %v51 = vpop.permute.xlu0 %50
    %54 = vset.pattern.permute.xlu0 0
    %55 = vperm.xlu0 %54, %v25
    %v56 = vpop.permute.xlu0 %55
    %59 = vset.pattern.permute.xlu0 0
    %60 = vperm.xlu0 %59, %v26
    %v61 = vpop.permute.xlu0 %60
    %64 = vset.pattern.permute.xlu0 0
    %65 = vperm.xlu0 %64, %v27
    %v66 = vpop.permute.xlu0 %65
    %v68 = vmul.f32 %v31, %v12
    %v69 = vmul.f32 %v36, %v13
    %v70 = vmul.f32 %v41, %v14
    %v71 = vmul.f32 %v46, %v15
    %v72 = vmul.f32 %v51, %v16
    %v73 = vmul.f32 %v56, %v17
    %v74 = vmul.f32 %v61, %v18
    %v75 = vmul.f32 %v66, %v19
    %v76 = vrot.slane %v68, 4
    %v77 = vadd.f32 %v68, %v76
    %v78 = vrot.slane %v77, 2
    %v79 = vadd.f32 %v77, %v78
    %v80 = vrot.slane %v79, 1
    %v81 = vadd.f32 %v79, %v80
    %v82 = vrot.slane %v69, 4
    %v83 = vadd.f32 %v69, %v82
    %v84 = vrot.slane %v83, 2
    %v85 = vadd.f32 %v83, %v84
    %v86 = vrot.slane %v85, 1
    %v87 = vadd.f32 %v85, %v86
    %v88 = vrot.slane %v70, 4
    %v89 = vadd.f32 %v70, %v88
    %v90 = vrot.slane %v89, 2
    %v91 = vadd.f32 %v89, %v90
    %v92 = vrot.slane %v91, 1
    %v93 = vadd.f32 %v91, %v92
    %v94 = vrot.slane %v71, 4
    %v95 = vadd.f32 %v71, %v94
    %v96 = vrot.slane %v95, 2
    %v97 = vadd.f32 %v95, %v96
    %v98 = vrot.slane %v97, 1
    %v99 = vadd.f32 %v97, %v98
    %v100 = vrot.slane %v72, 4
    %v101 = vadd.f32 %v72, %v100
    %v102 = vrot.slane %v101, 2
    %v103 = vadd.f32 %v101, %v102
    %v104 = vrot.slane %v103, 1
    %v105 = vadd.f32 %v103, %v104
    %v106 = vrot.slane %v73, 4
    %v107 = vadd.f32 %v73, %v106
    %v108 = vrot.slane %v107, 2
    %v109 = vadd.f32 %v107, %v108
    %v110 = vrot.slane %v109, 1
    %v111 = vadd.f32 %v109, %v110
    %v112 = vrot.slane %v74, 4
    %v113 = vadd.f32 %v74, %v112
    %v114 = vrot.slane %v113, 2
    %v115 = vadd.f32 %v113, %v114
    %v116 = vrot.slane %v115, 1
    %v117 = vadd.f32 %v115, %v116
    %v118 = vrot.slane %v75, 4
    %v119 = vadd.f32 %v75, %v118
    %v120 = vrot.slane %v119, 2
    %v121 = vadd.f32 %v119, %v120
    %v122 = vrot.slane %v121, 1
    %v123 = vadd.f32 %v121, %v122
    %vm124 = vcmask 7168
    %v125 = vsel %vm124, %v20, 0.0
    %v126 = vrot.slane %v125, 4
    %v127 = vadd.f32 %v125, %v126
    %v128 = vrot.slane %v127, 2
    %v129 = vadd.f32 %v127, %v128
    %v130 = vrot.slane %v129, 1
    %v131 = vadd.f32 %v129, %v130
    %v132 = vsel %vm124, %v21, 0.0
    %v133 = vrot.slane %v132, 4
    %v134 = vadd.f32 %v132, %v133
    %v135 = vrot.slane %v134, 2
    %v136 = vadd.f32 %v134, %v135
    %v137 = vrot.slane %v136, 1
    %v138 = vadd.f32 %v136, %v137
    %v139 = vsel %vm124, %v22, 0.0
    %v140 = vrot.slane %v139, 4
    %v141 = vadd.f32 %v139, %v140
    %v142 = vrot.slane %v141, 2
    %v143 = vadd.f32 %v141, %v142
    %v144 = vrot.slane %v143, 1
    %v145 = vadd.f32 %v143, %v144
    %v146 = vsel %vm124, %v23, 0.0
    %v147 = vrot.slane %v146, 4
    %v148 = vadd.f32 %v146, %v147
    %v149 = vrot.slane %v148, 2
    %v150 = vadd.f32 %v148, %v149
    %v151 = vrot.slane %v150, 1
    %v152 = vadd.f32 %v150, %v151
    %v153 = vsel %vm124, %v24, 0.0
    %v154 = vrot.slane %v153, 4
    %v155 = vadd.f32 %v153, %v154
    %v156 = vrot.slane %v155, 2
    %v157 = vadd.f32 %v155, %v156
    %v158 = vrot.slane %v157, 1
    %v159 = vadd.f32 %v157, %v158
    %v160 = vsel %vm124, %v25, 0.0
    %v161 = vrot.slane %v160, 4
    %v162 = vadd.f32 %v160, %v161
    %v163 = vrot.slane %v162, 2
    %v164 = vadd.f32 %v162, %v163
    %v165 = vrot.slane %v164, 1
    %v166 = vadd.f32 %v164, %v165
    %v167 = vsel %vm124, %v26, 0.0
    %v168 = vrot.slane %v167, 4
    %v169 = vadd.f32 %v167, %v168
    %v170 = vrot.slane %v169, 2
    %v171 = vadd.f32 %v169, %v170
    %v172 = vrot.slane %v171, 1
    %v173 = vadd.f32 %v171, %v172
    %v174 = vsel %vm124, %v27, 0.0
    %v175 = vrot.slane %v174, 4
    %v176 = vadd.f32 %v174, %v175
    %v177 = vrot.slane %v176, 2
    %v178 = vadd.f32 %v176, %v177
    %v179 = vrot.slane %v178, 1
    %v180 = vadd.f32 %v178, %v179
    %v181 = vadd.f32 %v131, 1e-10
    %v182 = vadd.f32 %v138, 1e-10
    %v183 = vadd.f32 %v145, 1e-10
    %v184 = vadd.f32 %v152, 1e-10
    %v185 = vadd.f32 %v159, 1e-10
    %v186 = vadd.f32 %v166, 1e-10
    %v187 = vadd.f32 %v173, 1e-10
    %v188 = vadd.f32 %v180, 1e-10
    %190 = vset.pattern.permute.xlu0 0
    %191 = vperm.xlu0 %190, %v181
    %v192 = vpop.permute.xlu0 %191
    %195 = vset.pattern.permute.xlu0 0
    %196 = vperm.xlu0 %195, %v182
    %v197 = vpop.permute.xlu0 %196
    %200 = vset.pattern.permute.xlu0 0
    %201 = vperm.xlu0 %200, %v183
    %v202 = vpop.permute.xlu0 %201
    %205 = vset.pattern.permute.xlu0 0
    %206 = vperm.xlu0 %205, %v184
    %v207 = vpop.permute.xlu0 %206
    %210 = vset.pattern.permute.xlu0 0
    %211 = vperm.xlu0 %210, %v185
    %v212 = vpop.permute.xlu0 %211
    %215 = vset.pattern.permute.xlu0 0
    %216 = vperm.xlu0 %215, %v186
    %v217 = vpop.permute.xlu0 %216
    %220 = vset.pattern.permute.xlu0 0
    %221 = vperm.xlu0 %220, %v187
    %v222 = vpop.permute.xlu0 %221
    %225 = vset.pattern.permute.xlu0 0
    %226 = vperm.xlu0 %225, %v188
    %v227 = vpop.permute.xlu0 %226
    %v229 = vrcp.pop %v192
    %v230 = vmul.f32 %v81, %v229
    %v231 = vrcp.pop %v197
    %v232 = vmul.f32 %v87, %v231
    %v233 = vrcp.pop %v202
    %v234 = vmul.f32 %v93, %v233
    %v235 = vrcp.pop %v207
    %v236 = vmul.f32 %v99, %v235
    %v237 = vrcp.pop %v212
    %v238 = vmul.f32 %v105, %v237
    %v239 = vrcp.pop %v217
    %v240 = vmul.f32 %v111, %v239
    %v241 = vrcp.pop %v222
    %v242 = vmul.f32 %v117, %v241
    %v243 = vrcp.pop %v227
    %v244 = vmul.f32 %v123, %v243
    %vm253 = vcmask 1041409
    %v254 = vsel %vm253, %v232, %v230
    %vm255 = vcmask 1042434
    %v256 = vsel %vm255, %v234, %v254
    %vm257 = vcmask 1043459
    %v258 = vsel %vm257, %v236, %v256
    %vm259 = vcmask 1044484
    %v260 = vsel %vm259, %v238, %v258
    %vm261 = vcmask 1045509
    %v262 = vsel %vm261, %v240, %v260
    %vm263 = vcmask 1046534
    %v264 = vsel %vm263, %v242, %v262
    %vm265 = vcmask 1047559
    %v266 = vsel %vm265, %v244, %v264
    %268 = vst [vmem:[#allocation2] sm:$0xff] %v266
    // Predicated region
    $region10: #{tpu_custom_call.1} parent=1 // pred_check
      _
    $region11: #{tpu_custom_call.1} parent=1 // pred_check_branch
      %270 = sbr.rel (0) target = $region13
    $region12: #{tpu_custom_call.1} parent=1 // pred_region
      %s272 = ssub.s32 128, 128
      %273 = vsyncadd [#allocation3], %s272
      %s275 = sshll.u32 [#allocation2], 4
      %s276 = int_to_ptr.vmem [resolvable:$true] %s275
      %278 = dma.vmem_to_hbm [thread:$0]  %s276, 128, %s2, [#allocation3]
    $region13: #{tpu_custom_call.1} parent=1 // pred_fallthru
      _
    // Predicated region
    $region14: #{tpu_custom_call.1} parent=1 // pred_check
      _
    $region15: #{tpu_custom_call.1} parent=1 // pred_check_branch
      %280 = sbr.rel (0) target = $region17
    $region16: #{tpu_custom_call.1} parent=1 // pred_region
      %281 = dma.done [#allocation3], 128
    $region17: #{tpu_custom_call.1} parent=1 // pred_fallthru
      _
    %282 = vsyncpa [#allocation3], 1

</llo_original>
